<compile_context>
chip_gen: v7x
topology: tpu7x:2x2x1
jax: 0.10.0
libtpu: 0.0.40
codegen_flags: <defaults>
</compile_context>

<pallas_src>
import functools

import jax
import jax.numpy as jnp
from jax.experimental import pallas as pl
from jax.experimental.pallas import tpu as pltpu


def _crs_entropy_kernel(emb_ref, tgt_ref, loss_ref, corr_ref,
                        loss_acc, corr_acc, *,
                        n_total, tile_n, mask_from_tile, any_mask):
    p = pl.program_id(0)          # core-split axis ("parallel")
    j = pl.program_id(1)          # per-core tile loop ("arbitrary", reduction)
    t_half = pl.num_programs(1)
    tile_id = p * t_half + j      # global tile index (may exceed #real tiles)

    @pl.when(j == 0)
    def _init():
        loss_acc[...] = jnp.zeros_like(loss_acc)
        corr_acc[...] = jnp.zeros_like(corr_acc)

    x = emb_ref[...].astype(jnp.float32)      # (tile_n, C) logits
    t = tgt_ref[...].astype(jnp.float32)      # (tile_n, C) class probabilities
    tn, c = x.shape

    # Numerically stable log-softmax pieces without materializing logp:
    #   logp = (x - m) - lse  =>  -sum_c t*logp = lse*sum_c(t) - sum_c(t*(x - m))
    m = jnp.max(x, axis=1, keepdims=True)                      # (tile_n, 1)
    z = x - m
    lse = jnp.log(jnp.sum(jnp.exp(z), axis=1, keepdims=True))  # (tile_n, 1)
    row_loss = (lse * jnp.sum(t, axis=1, keepdims=True)
                - jnp.sum(t * z, axis=1, keepdims=True))       # (tile_n, 1)

    # Argmax along the class (lane) axis, first occurrence on ties (x == m is
    # robust to +inf logits, unlike z == 0).
    lane_idx = jax.lax.broadcasted_iota(jnp.int32, (tn, c), 1)
    pred = jnp.min(jnp.where(x == m, lane_idx, c), axis=1, keepdims=True)
    t_max = jnp.max(t, axis=1, keepdims=True)
    lab = jnp.min(jnp.where(t == t_max, lane_idx, c), axis=1, keepdims=True)
    row_correct = (pred == lab).astype(jnp.int32)              # (tile_n, 1)

    def _accumulate(rl, rc):
        # Per-tile lane+sublane reduction to (1,1), accumulated in tiny scratch.
        loss_acc[...] += jnp.sum(rl, keepdims=True)
        corr_acc[...] += jnp.sum(rc, keepdims=True)

    if any_mask:
        needs_mask = tile_id >= mask_from_tile

        @pl.when(jnp.logical_not(needs_mask))
        def _steady():
            _accumulate(row_loss, row_correct)

        @pl.when(needs_mask)
        def _tail():
            # Partial last tile and/or clamped out-of-range duplicate tiles:
            # exclude padded / invalid rows (also keeps garbage/NaN out).
            row_idx = (tile_id * tile_n
                       + jax.lax.broadcasted_iota(jnp.int32, (tn, 1), 0))
            valid = row_idx < n_total
            _accumulate(jnp.where(valid, row_loss, 0.0),
                        jnp.where(valid, row_correct, 0))
    else:
        _accumulate(row_loss, row_correct)

    # Write this core's partial as a lane-dense full block at the end of its loop.
    @pl.when(j == t_half - 1)
    def _finalize():
        loss_ref[...] = jnp.broadcast_to(loss_acc[...], loss_ref.shape)
        corr_ref[...] = jnp.broadcast_to(corr_acc[...], corr_ref.shape)


def crs_entropy_loss(embeddings, gesture_type, *,
                     vmem_budget_bytes=40 * 1024 * 1024):
    """Returns (loss: f32 scalar, batch_correct: i32 scalar, batch_samples_num: int)."""
    # NOTE: for the pure one-hot case, an integer-label API would halve HBM reads;
    # kept dense (N, C) targets to match the PyTorch module's semantics.
    assert embeddings.shape == gesture_type.shape
    n, c = embeddings.shape

    ise = jnp.dtype(embeddings.dtype).itemsize
    ist = jnp.dtype(gesture_type.dtype).itemsize
    # Sublane packing: 8 rows/vreg for 4-byte, 16 for 2-byte inputs.
    sublane = max(8, 32 // min(ise, ist))

    # Pipelined footprint per batch row (both inputs, double-buffered).
    bytes_per_row = 2 * c * (ise + ist)
    tile_cap = max(sublane, (vmem_budget_bytes // bytes_per_row) // sublane * sublane)

    # Prefer >= 2 tiles so both v7x TensorCores get work, without shrinking tiles
    # below the VMEM-budget cap.
    half_rows = -(-((n + 1) // 2) // sublane) * sublane
    desired = min(tile_cap, max(sublane, half_rows))
    tile_n = n if desired >= n else desired

    num_tiles = pl.cdiv(n, tile_n)
    t_half = pl.cdiv(num_tiles, 2)          # tiles per core
    grid = (2, t_half)

    # Tiles needing row masking: the partial last tile (if any) and any clamped
    # out-of-range duplicate tiles when num_tiles is odd.
    mask_from_tile = num_tiles - 1 if (n % tile_n) != 0 else num_tiles
    any_mask = mask_from_tile < 2 * t_half

    def in_map(p, j):
        # Clamp so a core's extra step (odd tile count) re-reads a valid tile;
        # its rows are fully masked out in the kernel.
        return (jnp.minimum(p * t_half + j, num_tiles - 1), 0)

    kernel = functools.partial(_crs_entropy_kernel, n_total=n, tile_n=tile_n,
                               mask_from_tile=mask_from_tile, any_mask=any_mask)

    # Raise scoped VMEM above the (small) defaults on v5e/v6e; by construction the
    # footprint stays <= ~48 MiB so this also fits v7x's 64 MiB physical VMEM.
    vmem_limit = int(max(32 * 1024 * 1024,
                         bytes_per_row * tile_n + 8 * 1024 * 1024))

    loss_parts, corr_parts = pl.pallas_call(
        kernel,
        grid=grid,
        out_shape=(
            jax.ShapeDtypeStruct((2, 8, 128), jnp.float32),   # per-core partial loss
            jax.ShapeDtypeStruct((2, 8, 128), jnp.int32),     # per-core partial correct
        ),
        in_specs=[
            pl.BlockSpec((tile_n, c), in_map),
            pl.BlockSpec((tile_n, c), in_map),
        ],
        out_specs=(
            pl.BlockSpec((1, 8, 128), lambda p, j: (p, 0, 0)),
            pl.BlockSpec((1, 8, 128), lambda p, j: (p, 0, 0)),
        ),
        scratch_shapes=[
            pltpu.VMEM((1, 1), jnp.float32),   # per-core loss accumulator
            pltpu.VMEM((1, 1), jnp.int32),     # per-core correct accumulator
        ],
        compiler_params=pltpu.CompilerParams(
            dimension_semantics=("parallel", "arbitrary"),
            vmem_limit_bytes=vmem_limit,
        ),
    )(embeddings, gesture_type)

    loss = (loss_parts[0, 0, 0] + loss_parts[1, 0, 0]) * (1.0 / n)
    correct = corr_parts[0, 0, 0] + corr_parts[1, 0, 0]
    return loss, correct, n


def _reference(embeddings, gesture_type):
    logp = jax.nn.log_softmax(embeddings.astype(jnp.float32), axis=1)
    loss = -jnp.mean(jnp.sum(gesture_type.astype(jnp.float32) * logp, axis=1))
    pred = jnp.argmax(embeddings.astype(jnp.float32), axis=1)
    lab = jnp.argmax(gesture_type.astype(jnp.float32), axis=1)
    return loss, jnp.sum(pred == lab), gesture_type.shape[0]


if __name__ == "__main__":
    key = jax.random.PRNGKey(0)
    k1, k2 = jax.random.split(key)

    # Small batch of 8 samples, 32 gesture classes.
    N, C = 8, 32
    embeddings = jax.random.normal(k1, (N, C), dtype=jnp.float32)
    labels = jax.random.randint(k2, (N,), 0, C)
    gesture_type = jax.nn.one_hot(labels, C, dtype=jnp.float32)

    loss, correct, num = crs_entropy_loss(embeddings, gesture_type)
    jax.block_until_ready((loss, correct))

    ref_loss, ref_correct, ref_num = _reference(embeddings, gesture_type)
    assert num == ref_num
    assert abs(float(loss) - float(ref_loss)) < 1e-4, (loss, ref_loss)
    assert int(correct) == int(ref_correct), (correct, ref_correct)

    # Multi-tile path with a partial last tile (exercises masking + 2-core split).
    N2, C2 = 1037, 32
    kk1, kk2 = jax.random.split(jax.random.PRNGKey(1))
    emb2 = jax.random.normal(kk1, (N2, C2), dtype=jnp.float32)
    lab2 = jax.random.randint(kk2, (N2,), 0, C2)
    tgt2 = jax.nn.one_hot(lab2, C2, dtype=jnp.float32)
    loss2, corr2, num2 = crs_entropy_loss(emb2, tgt2)
    jax.block_until_ready((loss2, corr2))
    ref_loss2, ref_corr2, _ = _reference(emb2, tgt2)
    assert num2 == N2
    assert abs(float(loss2) - float(ref_loss2)) < 1e-3, (loss2, ref_loss2)
    assert int(corr2) == int(ref_corr2), (corr2, ref_corr2)

    # bf16 activations (dtype-aware tiling / internal f32 upcast path).
    N3, C3 = 64, 32
    kk3, kk4 = jax.random.split(jax.random.PRNGKey(2))
    emb3 = jax.random.normal(kk3, (N3, C3), dtype=jnp.float32).astype(jnp.bfloat16)
    lab3 = jax.random.randint(kk4, (N3,), 0, C3)
    tgt3 = jax.nn.one_hot(lab3, C3, dtype=jnp.float32)
    loss3, corr3, num3 = crs_entropy_loss(emb3, tgt3)
    jax.block_until_ready((loss3, corr3))
    ref_loss3, ref_corr3, _ = _reference(emb3, tgt3)
    assert num3 == N3
    assert abs(float(loss3) - float(ref_loss3)) < 1e-3, (loss3, ref_loss3)
    assert int(corr3) == int(ref_corr3), (corr3, ref_corr3)

    print("KERNEL_OK")
</pallas_src>

<mosaic_0001>
module attributes {stable_mosaic.version = 11 : i64} {
  func.func @_crs_entropy_kernel(%arg0: i32, %arg1: i32, %arg2: memref<8x32xf32, #tpu.memory_space<vmem>>, %arg3: memref<8x32xf32, #tpu.memory_space<vmem>>, %arg4: memref<1x8x128xf32, #tpu.memory_space<vmem>>, %arg5: memref<1x8x128xi32, #tpu.memory_space<vmem>>, %arg6: memref<1x1xf32, #tpu.memory_space<vmem>>, %arg7: memref<1x1xi32, #tpu.memory_space<vmem>>) attributes {dimension_semantics = [#tpu.dimension_semantics<parallel>, #tpu.dimension_semantics<arbitrary>], iteration_bounds = array<i64: 2, 1>, scalar_prefetch = 0 : i64, scratch_operands = 2 : i64, tpu.core_type = #tpu.core_type<tc>, window_params = [{transform_indices = @transform_0, window_bounds = array<i64: 8, 32>}, {transform_indices = @transform_1, window_bounds = array<i64: 8, 32>}, {transform_indices = @transform_2, window_bounds = array<i64: 1, 8, 128>}, {transform_indices = @transform_3, window_bounds = array<i64: 1, 8, 128>}]} {
    %c1_i32 = arith.constant 1 : i32
    %0 = arith.muli %arg0, %c1_i32 : i32
    %1 = arith.addi %0, %arg1 : i32
    %c0_i32 = arith.constant 0 : i32
    %2 = arith.cmpi eq, %arg1, %c0_i32 : i32
    %3 = arith.extui %2 : i1 to i32
    %c0_i32_0 = arith.constant 0 : i32
    %4 = arith.cmpi ne, %3, %c0_i32_0 : i32
    scf.if %4 {
      %cst_16 = arith.constant 0.000000e+00 : f32
      %48 = vector.broadcast %cst_16 : f32 to vector<1x1xf32>
      %c0_17 = arith.constant 0 : index
      %c0_18 = arith.constant 0 : index
      %49 = vector.load %arg6[%c0_17, %c0_18] : memref<1x1xf32, #tpu.memory_space<vmem>>, vector<1x1xf32>
      tpu.vector_store %arg6[%c0_17, %c0_18], %48 {strides = array<i32>} : memref<1x1xf32, #tpu.memory_space<vmem>>, vector<1x1xf32>,
      %c0_i32_19 = arith.constant 0 : i32
      %50 = vector.broadcast %c0_i32_19 : i32 to vector<1x1xi32>
      %c0_20 = arith.constant 0 : index
      %c0_21 = arith.constant 0 : index
      %51 = vector.load %arg7[%c0_20, %c0_21] : memref<1x1xi32, #tpu.memory_space<vmem>>, vector<1x1xi32>
      tpu.vector_store %arg7[%c0_20, %c0_21], %50 {strides = array<i32>} : memref<1x1xi32, #tpu.memory_space<vmem>>, vector<1x1xi32>,
    } else {
    }
    %c0 = arith.constant 0 : index
    %c0_1 = arith.constant 0 : index
    %5 = vector.load %arg2[%c0, %c0_1] : memref<8x32xf32, #tpu.memory_space<vmem>>, vector<8x32xf32>
    %c0_2 = arith.constant 0 : index
    %c0_3 = arith.constant 0 : index
    %6 = vector.load %arg3[%c0_2, %c0_3] : memref<8x32xf32, #tpu.memory_space<vmem>>, vector<8x32xf32>
    %cst = arith.constant dense<0xFF800000> : vector<8xf32>
    %7 = vector.multi_reduction <maximumf>, %5, %cst [1] : vector<8x32xf32> to vector<8xf32>
    %8 = vector.shape_cast %7 : vector<8xf32> to vector<8x1xf32>
    %9 = vector.broadcast %8 : vector<8x1xf32> to vector<8x32xf32>
    %10 = arith.subf %5, %9 : vector<8x32xf32>
    %11 = math.exp %10 : vector<8x32xf32>
    %cst_4 = arith.constant dense<0.000000e+00> : vector<8xf32>
    %12 = vector.multi_reduction <add>, %11, %cst_4 [1] : vector<8x32xf32> to vector<8xf32>
    %13 = vector.shape_cast %12 : vector<8xf32> to vector<8x1xf32>
    %14 = math.log %13 : vector<8x1xf32>
    %cst_5 = arith.constant dense<0.000000e+00> : vector<8xf32>
    %15 = vector.multi_reduction <add>, %6, %cst_5 [1] : vector<8x32xf32> to vector<8xf32>
    %16 = vector.shape_cast %15 : vector<8xf32> to vector<8x1xf32>
    %17 = arith.mulf %14, %16 : vector<8x1xf32>
    %18 = arith.mulf %6, %10 : vector<8x32xf32>
    %cst_6 = arith.constant dense<0.000000e+00> : vector<8xf32>
    %19 = vector.multi_reduction <add>, %18, %cst_6 [1] : vector<8x32xf32> to vector<8xf32>
    %20 = vector.shape_cast %19 : vector<8xf32> to vector<8x1xf32>
    %21 = arith.subf %17, %20 : vector<8x1xf32>
    %22 = tpu.iota {dimensions = array<i32: 1>} : vector<8x32xi32>
    %23 = vector.broadcast %8 : vector<8x1xf32> to vector<8x32xf32>
    %24 = arith.cmpf oeq, %5, %23 : vector<8x32xf32>
    %c32_i32 = arith.constant 32 : i32
    %25 = vector.broadcast %c32_i32 : i32 to vector<8x32xi32>
    %26 = arith.select %24, %22, %25 : vector<8x32xi1>, vector<8x32xi32>
    %cst_7 = arith.constant dense<2147483647> : vector<8xi32>
    %27 = vector.multi_reduction <minsi>, %26, %cst_7 [1] : vector<8x32xi32> to vector<8xi32>
    %28 = vector.shape_cast %27 : vector<8xi32> to vector<8x1xi32>
    %cst_8 = arith.constant dense<0xFF800000> : vector<8xf32>
    %29 = vector.multi_reduction <maximumf>, %6, %cst_8 [1] : vector<8x32xf32> to vector<8xf32>
    %30 = vector.shape_cast %29 : vector<8xf32> to vector<8x1xf32>
    %31 = vector.broadcast %30 : vector<8x1xf32> to vector<8x32xf32>
    %32 = arith.cmpf oeq, %6, %31 : vector<8x32xf32>
    %c32_i32_9 = arith.constant 32 : i32
    %33 = vector.broadcast %c32_i32_9 : i32 to vector<8x32xi32>
    %34 = arith.select %32, %22, %33 : vector<8x32xi1>, vector<8x32xi32>
    %cst_10 = arith.constant dense<2147483647> : vector<8xi32>
    %35 = vector.multi_reduction <minsi>, %34, %cst_10 [1] : vector<8x32xi32> to vector<8xi32>
    %36 = vector.shape_cast %35 : vector<8xi32> to vector<8x1xi32>
    %37 = arith.cmpi eq, %28, %36 : vector<8x1xi32>
    %38 = arith.extui %37 : vector<8x1xi1> to vector<8x1xi32>
    %c1_i32_11 = arith.constant 1 : i32
    %39 = arith.cmpi sge, %1, %c1_i32_11 : i32
    %true = arith.constant true
    %40 = arith.xori %39, %true : i1
    %41 = arith.extui %40 : i1 to i32
    %c0_i32_12 = arith.constant 0 : i32
    %42 = arith.cmpi ne, %41, %c0_i32_12 : i32
    scf.if %42 {
      %c0_16 = arith.constant 0 : index
      %c0_17 = arith.constant 0 : index
      %48 = vector.load %arg6[%c0_16, %c0_17] : memref<1x1xf32, #tpu.memory_space<vmem>>, vector<1x1xf32>
      %49 = vector.shape_cast %21 : vector<8x1xf32> to vector<1x8x1xf32>
      %cst_18 = arith.constant dense<0.000000e+00> : vector<1xf32>
      %50 = vector.multi_reduction <add>, %49, %cst_18 [1, 2] : vector<1x8x1xf32> to vector<1xf32>
      %51 = vector.shape_cast %50 : vector<1xf32> to vector<1x1x1xf32>
      %52 = vector.extract %51[0, 0, 0] : f32 from vector<1x1x1xf32>
      %53 = vector.broadcast %52 : f32 to vector<1x1xf32>
      %54 = arith.addf %48, %53 : vector<1x1xf32>
      %c0_19 = arith.constant 0 : index
      %c0_20 = arith.constant 0 : index
      %55 = vector.load %arg6[%c0_19, %c0_20] : memref<1x1xf32, #tpu.memory_space<vmem>>, vector<1x1xf32>
      tpu.vector_store %arg6[%c0_19, %c0_20], %54 {strides = array<i32>} : memref<1x1xf32, #tpu.memory_space<vmem>>, vector<1x1xf32>,
      %c0_21 = arith.constant 0 : index
      %c0_22 = arith.constant 0 : index
      %56 = vector.load %arg7[%c0_21, %c0_22] : memref<1x1xi32, #tpu.memory_space<vmem>>, vector<1x1xi32>
      %57 = vector.shape_cast %38 : vector<8x1xi32> to vector<1x8x1xi32>
      %cst_23 = arith.constant dense<0> : vector<1xi32>
      %58 = vector.multi_reduction <add>, %57, %cst_23 [1, 2] : vector<1x8x1xi32> to vector<1xi32>
      %59 = vector.shape_cast %58 : vector<1xi32> to vector<1x1x1xi32>
      %60 = vector.extract %59[0, 0, 0] : i32 from vector<1x1x1xi32>
      %61 = vector.broadcast %60 : i32 to vector<1x1xi32>
      %62 = arith.addi %56, %61 : vector<1x1xi32>
      %c0_24 = arith.constant 0 : index
      %c0_25 = arith.constant 0 : index
      %63 = vector.load %arg7[%c0_24, %c0_25] : memref<1x1xi32, #tpu.memory_space<vmem>>, vector<1x1xi32>
      tpu.vector_store %arg7[%c0_24, %c0_25], %62 {strides = array<i32>} : memref<1x1xi32, #tpu.memory_space<vmem>>, vector<1x1xi32>,
    } else {
    }
    %43 = arith.extui %39 : i1 to i32
    %c0_i32_13 = arith.constant 0 : i32
    %44 = arith.cmpi ne, %43, %c0_i32_13 : i32
    scf.if %44 {
      %c8_i32 = arith.constant 8 : i32
      %48 = arith.muli %1, %c8_i32 : i32
      %49 = tpu.iota {dimensions = array<i32: 0>} : vector<8x1xi32>
      %50 = vector.broadcast %48 : i32 to vector<8x1xi32>
      %51 = arith.addi %50, %49 : vector<8x1xi32>
      %c8_i32_16 = arith.constant 8 : i32
      %52 = vector.broadcast %c8_i32_16 : i32 to vector<8x1xi32>
      %53 = arith.cmpi slt, %51, %52 : vector<8x1xi32>
      %cst_17 = arith.constant 0.000000e+00 : f32
      %54 = vector.broadcast %cst_17 : f32 to vector<8x1xf32>
      %55 = arith.select %53, %21, %54 : vector<8x1xi1>, vector<8x1xf32>
      %c0_i32_18 = arith.constant 0 : i32
      %56 = vector.broadcast %c0_i32_18 : i32 to vector<8x1xi32>
      %57 = arith.select %53, %38, %56 : vector<8x1xi1>, vector<8x1xi32>
      %c0_19 = arith.constant 0 : index
      %c0_20 = arith.constant 0 : index
      %58 = vector.load %arg6[%c0_19, %c0_20] : memref<1x1xf32, #tpu.memory_space<vmem>>, vector<1x1xf32>
      %59 = vector.shape_cast %55 : vector<8x1xf32> to vector<1x8x1xf32>
      %cst_21 = arith.constant dense<0.000000e+00> : vector<1xf32>
      %60 = vector.multi_reduction <add>, %59, %cst_21 [1, 2] : vector<1x8x1xf32> to vector<1xf32>
      %61 = vector.shape_cast %60 : vector<1xf32> to vector<1x1x1xf32>
      %62 = vector.extract %61[0, 0, 0] : f32 from vector<1x1x1xf32>
      %63 = vector.broadcast %62 : f32 to vector<1x1xf32>
      %64 = arith.addf %58, %63 : vector<1x1xf32>
      %c0_22 = arith.constant 0 : index
      %c0_23 = arith.constant 0 : index
      %65 = vector.load %arg6[%c0_22, %c0_23] : memref<1x1xf32, #tpu.memory_space<vmem>>, vector<1x1xf32>
      tpu.vector_store %arg6[%c0_22, %c0_23], %64 {strides = array<i32>} : memref<1x1xf32, #tpu.memory_space<vmem>>, vector<1x1xf32>,
      %c0_24 = arith.constant 0 : index
      %c0_25 = arith.constant 0 : index
      %66 = vector.load %arg7[%c0_24, %c0_25] : memref<1x1xi32, #tpu.memory_space<vmem>>, vector<1x1xi32>
      %67 = vector.shape_cast %57 : vector<8x1xi32> to vector<1x8x1xi32>
      %cst_26 = arith.constant dense<0> : vector<1xi32>
      %68 = vector.multi_reduction <add>, %67, %cst_26 [1, 2] : vector<1x8x1xi32> to vector<1xi32>
      %69 = vector.shape_cast %68 : vector<1xi32> to vector<1x1x1xi32>
      %70 = vector.extract %69[0, 0, 0] : i32 from vector<1x1x1xi32>
      %71 = vector.broadcast %70 : i32 to vector<1x1xi32>
      %72 = arith.addi %66, %71 : vector<1x1xi32>
      %c0_27 = arith.constant 0 : index
      %c0_28 = arith.constant 0 : index
      %73 = vector.load %arg7[%c0_27, %c0_28] : memref<1x1xi32, #tpu.memory_space<vmem>>, vector<1x1xi32>
      tpu.vector_store %arg7[%c0_27, %c0_28], %72 {strides = array<i32>} : memref<1x1xi32, #tpu.memory_space<vmem>>, vector<1x1xi32>,
    } else {
    }
    %c0_i32_14 = arith.constant 0 : i32
    %45 = arith.cmpi eq, %arg1, %c0_i32_14 : i32
    %46 = arith.extui %45 : i1 to i32
    %c0_i32_15 = arith.constant 0 : i32
    %47 = arith.cmpi ne, %46, %c0_i32_15 : i32
    scf.if %47 {
      %c0_16 = arith.constant 0 : index
      %c0_17 = arith.constant 0 : index
      %48 = vector.load %arg6[%c0_16, %c0_17] : memref<1x1xf32, #tpu.memory_space<vmem>>, vector<1x1xf32>
      %49 = vector.shape_cast %48 : vector<1x1xf32> to vector<1x1x1xf32>
      %50 = vector.broadcast %49 : vector<1x1x1xf32> to vector<1x8x128xf32>
      %c0_18 = arith.constant 0 : index
      %c0_19 = arith.constant 0 : index
      %c0_20 = arith.constant 0 : index
      %51 = vector.load %arg4[%c0_18, %c0_19, %c0_20] : memref<1x8x128xf32, #tpu.memory_space<vmem>>, vector<1x8x128xf32>
      tpu.vector_store %arg4[%c0_18, %c0_19, %c0_20], %50 {strides = array<i32>} : memref<1x8x128xf32, #tpu.memory_space<vmem>>, vector<1x8x128xf32>,
      %c0_21 = arith.constant 0 : index
      %c0_22 = arith.constant 0 : index
      %52 = vector.load %arg7[%c0_21, %c0_22] : memref<1x1xi32, #tpu.memory_space<vmem>>, vector<1x1xi32>
      %53 = vector.shape_cast %52 : vector<1x1xi32> to vector<1x1x1xi32>
      %54 = vector.broadcast %53 : vector<1x1x1xi32> to vector<1x8x128xi32>
      %c0_23 = arith.constant 0 : index
      %c0_24 = arith.constant 0 : index
      %c0_25 = arith.constant 0 : index
      %55 = vector.load %arg5[%c0_23, %c0_24, %c0_25] : memref<1x8x128xi32, #tpu.memory_space<vmem>>, vector<1x8x128xi32>
      tpu.vector_store %arg5[%c0_23, %c0_24, %c0_25], %54 {strides = array<i32>} : memref<1x8x128xi32, #tpu.memory_space<vmem>>, vector<1x8x128xi32>,
    } else {
    }
    return
  }
  func.func @transform_0(%arg0: i32, %arg1: i32) -> (i32, i32) {
    %c1_i32 = arith.constant 1 : i32
    %0 = arith.muli %arg0, %c1_i32 : i32
    %1 = arith.addi %0, %arg1 : i32
    %c0_i32 = arith.constant 0 : i32
    %2 = arith.minsi %1, %c0_i32 : i32
    %c0_i32_0 = arith.constant 0 : i32
    %c0_i32_1 = arith.constant 0 : i32
    return %2, %c0_i32_0 : i32, i32
  }
  func.func @transform_1(%arg0: i32, %arg1: i32) -> (i32, i32) {
    %c1_i32 = arith.constant 1 : i32
    %0 = arith.muli %arg0, %c1_i32 : i32
    %1 = arith.addi %0, %arg1 : i32
    %c0_i32 = arith.constant 0 : i32
    %2 = arith.minsi %1, %c0_i32 : i32
    %c0_i32_0 = arith.constant 0 : i32
    %c0_i32_1 = arith.constant 0 : i32
    return %2, %c0_i32_0 : i32, i32
  }
  func.func @transform_2(%arg0: i32, %arg1: i32) -> (i32, i32, i32) {
    %c0_i32 = arith.constant 0 : i32
    %c0_i32_0 = arith.constant 0 : i32
    %c0_i32_1 = arith.constant 0 : i32
    return %arg0, %c0_i32, %c0_i32_0 : i32, i32, i32
  }
  func.func @transform_3(%arg0: i32, %arg1: i32) -> (i32, i32, i32) {
    %c0_i32 = arith.constant 0 : i32
    %c0_i32_0 = arith.constant 0 : i32
    %c0_i32_1 = arith.constant 0 : i32
    return %arg0, %c0_i32, %c0_i32_0 : i32, i32, i32
  }
}

</mosaic_0001>

<llo_original>
// kernel: tpu_custom_call.1
$region0: #{tpu_custom_call.1}
  #allocation0 [shape = 'u32[]', space=smem, size = 0x4, offset = 0x4, fixed_abs, tag = 'smem constant byte address 0x4 - core index']
  #allocation1 [shape = 'u32[144,128]{1,0:T(1,128)}', space=vmem, size = 0x12000, scoped, tag = 'internal scratch']
  #allocation2 [shape = 'f32[1,1]{1,0:T(1,128)}', space=vmem, size = 0x200, scoped, tag = 'scratch operand']
  #allocation3 [shape = 's32[1,1]{1,0:T(1,128)}', space=vmem, size = 0x200, scoped, tag = 'scratch operand']
  %s0 = inlined_call_operand.hbm [shape: f32[8,32], index: 0, kind: input, shape index: {}]
  %s1 = inlined_call_operand.hbm [shape: f32[8,32], index: 1, kind: input, shape index: {}]
  %s2 = inlined_call_operand.hbm [shape: f32[2,8,128], index: 2, kind: output, shape index: {0}]
  %s3 = inlined_call_operand.hbm [shape: s32[2,8,128], index: 3, kind: output, shape index: {1}]
  %4 = xla_tuple %s2, %s3
  %s5 = sld [smem:[#allocation0]]
  $region73: #{tpu_custom_call.1} parent=0
    _
  %s7 = ssub.s32 1, %s5
  %s8 = scalar_select 0, %s7, %s5
  $region1: #{tpu_custom_call.1} parent=0
    #allocation4 [shape = 'u8[8192]{0}', space=vmem, size = 0x2000, scoped, tag = 'input window, operand 0']
    #allocation5 [shape = 's32[2]{0}', space=sflag, size = 0x8, scoped, tag = 'scoped memory for tpu_custom_call.1']
    #allocation6 [shape = 's32[2]{0}', space=sflag, size = 0x8, scoped, tag = 'scoped memory for tpu_custom_call.1']
    #allocation7 [shape = 'u8[8192]{0}', space=vmem, size = 0x2000, scoped, tag = 'input window, operand 1']
    #allocation8 [shape = 's32[2]{0}', space=sflag, size = 0x8, scoped, tag = 'scoped memory for tpu_custom_call.1']
    #allocation9 [shape = 'u8[8192]{0}', space=vmem, size = 0x2000, scoped, tag = 'output window, operand 0']
    #allocation10 [shape = 'u8[8192]{0}', space=vmem, size = 0x2000, scoped, tag = 'output window, operand 1']
    #allocation11 [shape = 's32[2]{0}', space=sflag, size = 0x8, scoped, tag = 'scoped memory for tpu_custom_call.1']
    %9 = vsyncpa [#allocation5], 0
    %s10 = scalar_lea.sflag [#allocation5], 1
    %11 = vsyncpa %s10, 0
    %12 = vsyncpa [#allocation8], 0
    %s13 = scalar_lea.sflag [#allocation8], 1
    %14 = vsyncpa %s13, 0
    %15 = vsyncpa [#allocation6], 0
    %s16 = scalar_lea.sflag [#allocation6], 1
    %17 = vsyncpa %s16, 0
    %18 = vsyncpa [#allocation11], 0
    %s19 = scalar_lea.sflag [#allocation11], 1
    %20 = vsyncpa %s19, 0
    loop: start=0, step=1, limit=4
    $region2: #{tpu_custom_call.1} parent=1 // loop_pre_header
      _
    $region3: #{tpu_custom_call.1} parent=1 // loop_header
      %s22 = sphi 0, %s26
      %p23 = scmp.ge.s32.totalorder %s22, 4
      %s29 = sphi 0, %s41
      %s30 = sphi 0, %s37
      %s31 = sphi 0, %s29
      %s32 = sphi 0, %s30
      %s33 = sphi 0, %s31
      %s34 = sphi 0, %s32
      %s50 = sphi 0, %s52
      %s53 = sphi 0, %s50
      %s54 = sphi 0, %s53
      %s70 = sphi 0, %s54
      %s82 = sphi 0, %s84
      %s85 = sphi 0, %s82
      %s86 = sphi 0, %s85
      %s102 = sphi 0, %s86
      %s108 = sphi 0, %s110
      %s111 = sphi 0, %s108
      %s112 = sphi 0, %s111
      %s128 = sphi 0, %s112
      %s134 = sphi 0, %s136
      %s137 = sphi 0, %s134
      %s138 = sphi 0, %s137
      %s154 = sphi 0, %s138
    $region4: #{tpu_custom_call.1} parent=1 // loop_header_branch
      %25 = sbr.rel (%p23) target = $region8
    $region5: #{tpu_custom_call.1} parent=1 // loop_body
      %s27 = ssub.s32 %s22, 1
      %s28 = ssub.s32 %s22, 2
      %s35 = sadd.s32 1, %s30
      %p36 = scmp.ge.s32.totalorder %s35, 1
      %s37 = scalar_select %p36, 0, %s35
      %s38 = sadd.s32 1, %s29
      %s39 = scalar_select %p36, %s38, %s29
      %p40 = scmp.ge.s32.totalorder %s39, 2
      %s41 = scalar_select %p40, 0, %s39
      %s42 = sadd.s32 %s29, %s30
      %p43 = scmp.lt.s32.totalorder %s42, 0
      %s44 = scalar_select %p43, %s42, 0
      %s45 = sadd.s32 %s41, %s37
      %p46 = scmp.lt.s32.totalorder %s45, 0
      %s47 = scalar_select %p46, %s45, 0
      %s48 = ssub.s32 %s44, %s47
      %p49 = scmp.eq.s32.totalorder %s48, 0
      %s51 = sadd.s32 %s50, 1
      %s52 = scalar_select %p49, %s50, %s51
      %p55 = pneg %p49
      %p56 = scmp.eq.s32.totalorder %s22, 1
      %p57 = por %p55, %p56
      %p58 = scmp.ne.s32.totalorder %s50, %s53
      %p59 = scmp.eq.s32.totalorder %s22, 0
      %p60 = por %p58, %p59
      %p61 = scmp.ne.s32.totalorder %s50, %s53
      %p62 = scmp.eq.s32.totalorder %s27, 1
      %p63 = por %p61, %p62
      %p64 = scmp.ne.s32.totalorder %s53, %s54
      %p65 = scmp.eq.s32.totalorder %s27, 0
      %p66 = por %p64, %p65
      %p67 = scmp.ne.s32.totalorder %s53, %s54
      %p68 = scmp.eq.s32.totalorder %s28, 1
      %p69 = por %p67, %p68
      %p71 = scmp.ne.s32.totalorder %s54, %s70
      %p72 = scmp.eq.s32.totalorder %s28, 0
      %p73 = por %p71, %p72
      %s74 = sadd.s32 %s29, %s30
      %p75 = scmp.lt.s32.totalorder %s74, 0
      %s76 = scalar_select %p75, %s74, 0
      %s77 = sadd.s32 %s41, %s37
      %p78 = scmp.lt.s32.totalorder %s77, 0
      %s79 = scalar_select %p78, %s77, 0
      %s80 = ssub.s32 %s76, %s79
      %p81 = scmp.eq.s32.totalorder %s80, 0
      %s83 = sadd.s32 %s82, 1
      %s84 = scalar_select %p81, %s82, %s83
      %p87 = pneg %p81
      %p88 = scmp.eq.s32.totalorder %s22, 1
      %p89 = por %p87, %p88
      %p90 = scmp.ne.s32.totalorder %s82, %s85
      %p91 = scmp.eq.s32.totalorder %s22, 0
      %p92 = por %p90, %p91
      %p93 = scmp.ne.s32.totalorder %s82, %s85
      %p94 = scmp.eq.s32.totalorder %s27, 1
      %p95 = por %p93, %p94
      %p96 = scmp.ne.s32.totalorder %s85, %s86
      %p97 = scmp.eq.s32.totalorder %s27, 0
      %p98 = por %p96, %p97
      %p99 = scmp.ne.s32.totalorder %s85, %s86
      %p100 = scmp.eq.s32.totalorder %s28, 1
      %p101 = por %p99, %p100
      %p103 = scmp.ne.s32.totalorder %s86, %s102
      %p104 = scmp.eq.s32.totalorder %s28, 0
      %p105 = por %p103, %p104
      %s106 = ssub.s32 %s29, %s41
      %p107 = scmp.eq.s32.totalorder %s106, 0
      %s109 = sadd.s32 %s108, 1
      %s110 = scalar_select %p107, %s108, %s109
      %p113 = pneg %p107
      %p114 = scmp.eq.s32.totalorder %s22, 1
      %p115 = por %p113, %p114
      %p116 = scmp.ne.s32.totalorder %s108, %s111
      %p117 = scmp.eq.s32.totalorder %s22, 0
      %p118 = por %p116, %p117
      %p119 = scmp.ne.s32.totalorder %s108, %s111
      %p120 = scmp.eq.s32.totalorder %s27, 1
      %p121 = por %p119, %p120
      %p122 = scmp.ne.s32.totalorder %s111, %s112
      %p123 = scmp.eq.s32.totalorder %s27, 0
      %p124 = por %p122, %p123
      %p125 = scmp.ne.s32.totalorder %s111, %s112
      %p126 = scmp.eq.s32.totalorder %s28, 1
      %p127 = por %p125, %p126
      %p129 = scmp.ne.s32.totalorder %s112, %s128
      %p130 = scmp.eq.s32.totalorder %s28, 0
      %p131 = por %p129, %p130
      %s132 = ssub.s32 %s29, %s41
      %p133 = scmp.eq.s32.totalorder %s132, 0
      %s135 = sadd.s32 %s134, 1
      %s136 = scalar_select %p133, %s134, %s135
      %p139 = pneg %p133
      %p140 = scmp.eq.s32.totalorder %s22, 1
      %p141 = por %p139, %p140
      %p142 = scmp.ne.s32.totalorder %s134, %s137
      %p143 = scmp.eq.s32.totalorder %s22, 0
      %p144 = por %p142, %p143
      %p145 = scmp.ne.s32.totalorder %s134, %s137
      %p146 = scmp.eq.s32.totalorder %s27, 1
      %p147 = por %p145, %p146
      %p148 = scmp.ne.s32.totalorder %s137, %s138
      %p149 = scmp.eq.s32.totalorder %s27, 0
      %p150 = por %p148, %p149
      %p151 = scmp.ne.s32.totalorder %s137, %s138
      %p152 = scmp.eq.s32.totalorder %s28, 1
      %p153 = por %p151, %p152
      %p155 = scmp.ne.s32.totalorder %s138, %s154
      %p156 = scmp.eq.s32.totalorder %s28, 0
      %p157 = por %p155, %p156
      %p158 = scmp.le.s32.totalorder 1, %s22
      %p159 = scmp.lt.s32.totalorder %s22, 3
      %p160 = pnand %p158, %p159
      %p161 = pneg %p160
      // Predicated region
      $region9: #{tpu_custom_call.1} parent=5 // pred_check
        _
      $region10: #{tpu_custom_call.1} parent=5 // pred_check_branch
        %163 = sbr.rel (%p160) target = $region12
      $region11: #{tpu_custom_call.1} parent=5 // pred_region
        %s164 = ssub.s32 %s22, 1
      $region12: #{tpu_custom_call.1} parent=5 // pred_fallthru
        _
      %p165 = scmp.lt.s32.totalorder %s22, 2
      // Predicated region
      $region13: #{tpu_custom_call.1} parent=5 // pred_check
        %p166 = pneg %p165
      $region14: #{tpu_custom_call.1} parent=5 // pred_check_branch
        %168 = sbr.rel (%p166) target = $region16
      $region15: #{tpu_custom_call.1} parent=5 // pred_region
        // Predicated region
        $region17: #{tpu_custom_call.1} parent=15 // pred_check
          %p169 = pneg %p60
        $region18: #{tpu_custom_call.1} parent=15 // pred_check_branch
          %171 = sbr.rel (%p169) target = $region20
        $region19: #{tpu_custom_call.1} parent=15 // pred_region
          %s172 = sand.u32 %s50, 1
          %s173 = scalar_lea.sflag [#allocation5], %s172
          %s174 = sand.u32 %s50, 1
          %s175 = smul.addr %s174, 8
          %s176 = scalar_lea.vmem [#allocation4], %s175
          %s177 = sadd.s32 %s29, %s30
          %p178 = scmp.lt.s32.totalorder %s177, 0
          %s179 = scalar_select %p178, %s177, 0
          %s181 = ssub.s32 128, 128
          %182 = vsyncadd %s173, %s181
          %s183 = smul.addr %s179, 128
          %s184 = scalar_lea.hbm %s0, %s183
          %s186 = sshll.u32 %s176, 4
          %s187 = int_to_ptr.vmem [resolvable:$true] %s186
          %189 = dma.hbm_to_vmem [thread:$0]  %s184, 128, %s187, %s173
        $region20: #{tpu_custom_call.1} parent=15 // pred_fallthru
          _
        // Predicated region
        $region21: #{tpu_custom_call.1} parent=15 // pred_check
          %p190 = pneg %p92
        $region22: #{tpu_custom_call.1} parent=15 // pred_check_branch
          %192 = sbr.rel (%p190) target = $region24
        $region23: #{tpu_custom_call.1} parent=15 // pred_region
          %s193 = sand.u32 %s82, 1
          %s194 = scalar_lea.sflag [#allocation8], %s193
          %s195 = sand.u32 %s82, 1
          %s196 = smul.addr %s195, 8
          %s197 = scalar_lea.vmem [#allocation7], %s196
          %s198 = sadd.s32 %s29, %s30
          %p199 = scmp.lt.s32.totalorder %s198, 0
          %s200 = scalar_select %p199, %s198, 0
          %s202 = ssub.s32 128, 128
          %203 = vsyncadd %s194, %s202
          %s204 = smul.addr %s200, 128
          %s205 = scalar_lea.hbm %s1, %s204
          %s207 = sshll.u32 %s197, 4
          %s208 = int_to_ptr.vmem [resolvable:$true] %s207
          %210 = dma.hbm_to_vmem [thread:$0]  %s205, 128, %s208, %s194
        $region24: #{tpu_custom_call.1} parent=15 // pred_fallthru
          _
      $region16: #{tpu_custom_call.1} parent=5 // pred_fallthru
        _
      %p211 = scmp.le.s32.totalorder 1, %s22
      %p212 = scmp.lt.s32.totalorder %s22, 3
      %p213 = pnand %p211, %p212
      %p214 = pneg %p213
      // Predicated region
      $region25: #{tpu_custom_call.1} parent=5 // pred_check
        _
      $region26: #{tpu_custom_call.1} parent=5 // pred_check_branch
        %216 = sbr.rel (%p213) target = $region28
      $region27: #{tpu_custom_call.1} parent=5 // pred_region
        %s217 = ssub.s32 %s22, 1
        %s218 = sand.u32 %s53, 1
        %s219 = scalar_lea.sflag [#allocation5], %s218
        %s220 = sand.u32 %s53, 1
        %s221 = smul.addr %s220, 8
        %s222 = scalar_lea.vmem [#allocation4], %s221
        // Predicated region
        $region29: #{tpu_custom_call.1} parent=27 // pred_check
          %p223 = pneg %p66
        $region30: #{tpu_custom_call.1} parent=27 // pred_check_branch
          %225 = sbr.rel (%p223) target = $region32
        $region31: #{tpu_custom_call.1} parent=27 // pred_region
          %226 = dma.done %s219, 128
        $region32: #{tpu_custom_call.1} parent=27 // pred_fallthru
          _
        %s227 = sand.u32 %s85, 1
        %s228 = scalar_lea.sflag [#allocation8], %s227
        %s229 = sand.u32 %s85, 1
        %s230 = smul.addr %s229, 8
        %s231 = scalar_lea.vmem [#allocation7], %s230
        // Predicated region
        $region33: #{tpu_custom_call.1} parent=27 // pred_check
          %p232 = pneg %p98
        $region34: #{tpu_custom_call.1} parent=27 // pred_check_branch
          %234 = sbr.rel (%p232) target = $region36
        $region35: #{tpu_custom_call.1} parent=27 // pred_region
          %235 = dma.done %s228, 128
        $region36: #{tpu_custom_call.1} parent=27 // pred_fallthru
          _
        %s236 = sand.u32 %s53, 1
        %s237 = scalar_lea.sflag [#allocation5], %s236
        %s238 = sand.u32 %s53, 1
        %s239 = smul.addr %s238, 8
        %s240 = scalar_lea.vmem [#allocation4], %s239
        %p241 = pneg %p66
        %p242 = pneg %p63
        %s243 = sand.u32 %s85, 1
        %s244 = scalar_lea.sflag [#allocation8], %s243
        %s245 = sand.u32 %s85, 1
        %s246 = smul.addr %s245, 8
        %s247 = scalar_lea.vmem [#allocation7], %s246
        %p248 = pneg %p98
        %p249 = pneg %p95
        %p250 = pneg %p124
        %p251 = pneg %p121
        %s252 = sand.u32 %s111, 1
        %s253 = scalar_lea.sflag [#allocation6], %s252
        %s254 = sand.u32 %s111, 1
        %s255 = smul.addr %s254, 8
        %s256 = scalar_lea.vmem [#allocation9], %s255
        %p257 = pneg %p150
        %p258 = pneg %p147
        %s259 = sand.u32 %s137, 1
        %s260 = scalar_lea.sflag [#allocation11], %s259
        %s261 = sand.u32 %s137, 1
        %s262 = smul.addr %s261, 8
        %s263 = scalar_lea.vmem [#allocation10], %s262
        %s264 = sadd.s32 %s31, %s32
        %p265 = scmp.lt.s32.totalorder %s264, 0
        %s266 = scalar_select %p265, %s264, 0
        %s267 = sadd.s32 %s31, %s32
        %p268 = scmp.lt.s32.totalorder %s267, 0
        %s269 = scalar_select %p268, %s267, 0
        %s270 = sadd.s32 %s31, %s32
        %p271 = scmp.eq.s32.totalorder %s32, 0
        // Predicated region
        $region37: #{tpu_custom_call.1} parent=27 // pred_check
          %p272 = pneg %p271
        $region38: #{tpu_custom_call.1} parent=27 // pred_check_branch
          %274 = sbr.rel (%p272) target = $region40
        $region39: #{tpu_custom_call.1} parent=27 // pred_region
          %vm275 = vcmask 0
          %276 = vst.msk [vmem:[#allocation2] sm:$0x1] %vm275, 0.0
          %277 = vst.msk [vmem:[#allocation3] sm:$0x1] %vm275, 0
        $region40: #{tpu_custom_call.1} parent=27 // pred_fallthru
          _
        %v278 = vld [vmem:[%s222] sm:$0xff]
        %v279 = vld [vmem:[%s231] sm:$0xff]
        %vm280 = vcmask 261120
        %v281 = vsel %vm280, %v278, -inf
        %282 = vmax.xlane.f32.xlu0 %v281
        %v283 = vpop.xlane.xlu0 %282
        %v284 = vsub.f32 %v278, %v283
        %v285 = vmul.f32 %v284, 1.442695
        %v286 = vpow.pop %v285
        %v287 = vsel %vm280, %v286, 0.0
        %288 = vadd.xlane.f32.xlu0 %v287
        %v289 = vpop.xlane.xlu0 %288
        %v290 = vlog2.pop %v289
        %v291 = vmul.f32 %v290, 0.6931472
        %v292 = vsel %vm280, %v279, 0.0
        %293 = vadd.xlane.f32.xlu0 %v292
        %v294 = vpop.xlane.xlu0 %293
        %v295 = vmul.f32 %v291, %v294
        %v296 = vmul.f32 %v279, %v284
        %v297 = vsel %vm280, %v296, 0.0
        %298 = vadd.xlane.f32.xlu0 %v297
        %v299 = vpop.xlane.xlu0 %298
        %v300 = vsub.f32 %v295, %v299
        %v301 = vlaneseq
        %v302 = vand.u32 %v301, 127
        %vm303 = vcmp.eq.f32.partialorder %v278, %v283
        %v304 = vsel %vm303, %v302, 32
        %v305 = vsel %vm280, %v304, 2147483647
        %v306 = vand.u32 %v305, 65535
        %v307 = vshra.s32 %v305, 16
        %v308 = vcvt.s32.f32 %v306
        %v309 = vcvt.s32.f32 %v307
        %310 = vmin.xlane.f32.xlu0 %v309
        %v311 = vpop.xlane.xlu0 %310
        %vm312 = vcmp.eq.f32.partialorder %v309, %v311
        %v313 = vsel %vm312, %v308, inf
        %314 = vmin.xlane.f32.xlu0 %v313
        %v315 = vpop.xlane.xlu0 %314
        %v316 = vcvt.f32.s32 %v315
        %v317 = vcvt.f32.s32 %v311
        %v318 = vshll.u32 %v317, 16
        %v319 = vadd.s32 %v318, %v316
        %v320 = vsel %vm280, %v279, -inf
        %321 = vmax.xlane.f32.xlu0 %v320
        %v322 = vpop.xlane.xlu0 %321
        %vm323 = vcmp.eq.f32.partialorder %v279, %v322
        %v324 = vsel %vm323, %v302, 32
        %v325 = vsel %vm280, %v324, 2147483647
        %v326 = vand.u32 %v325, 65535
        %v327 = vshra.s32 %v325, 16
        %v328 = vcvt.s32.f32 %v326
        %v329 = vcvt.s32.f32 %v327
        %330 = vmin.xlane.f32.xlu0 %v329
        %v331 = vpop.xlane.xlu0 %330
        %vm332 = vcmp.eq.f32.partialorder %v329, %v331
        %v333 = vsel %vm332, %v328, inf
        %334 = vmin.xlane.f32.xlu0 %v333
        %v335 = vpop.xlane.xlu0 %334
        %v336 = vcvt.f32.s32 %v335
        %v337 = vcvt.f32.s32 %v331
        %v338 = vshll.u32 %v337, 16
        %v339 = vadd.s32 %v338, %v336
        %vm340 = vcmp.eq.s32.totalorder %v319, %v339
        %v341 = vsel %vm340, 1, 0
        %p342 = scmp.ge.s32.totalorder %s270, 1
        %p343 = scmp.lt.s32.totalorder %s270, 1
        // Predicated region
        $region41: #{tpu_custom_call.1} parent=27 // pred_check
          %p344 = pneg %p343
        $region42: #{tpu_custom_call.1} parent=27 // pred_check_branch
          %346 = sbr.rel (%p344) target = $region44
        $region43: #{tpu_custom_call.1} parent=27 // pred_region
          %v347 = vld [vmem:[#allocation2] sm:$0x1]
          %vm348 = vcmask 7168
          %v349 = vsel %vm348, %v300, 0.0
          %350 = vadd.xlane.f32.xlu0 %v349
          %v351 = vpop.xlane.xlu0 %350
          %v352 = vrot.slane %v351, 4
          %v353 = vadd.f32 %v351, %v352
          %v354 = vrot.slane %v353, 2
          %v355 = vadd.f32 %v353, %v354
          %v356 = vrot.slane %v355, 1
          %v357 = vadd.f32 %v355, %v356
          %s358 = vtos %v357
          %v359 = vstv %s358
          %v360 = vadd.f32 %v347, %v359
          %vm361 = vcmask 0
          %362 = vst.msk [vmem:[#allocation2] sm:$0x1] %vm361, %v360
          %v363 = vld [vmem:[#allocation3] sm:$0x1]
          %v364 = vrot.slane %v341, 4
          %v365 = vadd.s32 %v341, %v364
          %v366 = vrot.slane %v365, 2
          %v367 = vadd.s32 %v365, %v366
          %v368 = vrot.slane %v367, 1
          %v369 = vadd.s32 %v367, %v368
          %s370 = vtos %v369
          %v371 = vstv %s370
          %v372 = vadd.s32 %v363, %v371
          %373 = vst.msk [vmem:[#allocation3] sm:$0x1] %vm361, %v372
        $region44: #{tpu_custom_call.1} parent=27 // pred_fallthru
          _
        // Predicated region
        $region45: #{tpu_custom_call.1} parent=27 // pred_check
          %p374 = pneg %p342
        $region46: #{tpu_custom_call.1} parent=27 // pred_check_branch
          %376 = sbr.rel (%p374) target = $region48
        $region47: #{tpu_custom_call.1} parent=27 // pred_region
          %s377 = smul.u32 %s270, 8
          %v378 = vlaneseq
          %v379 = vshrl.u32 %v378, 7
          %v380 = vstv %s377
          %v381 = vadd.s32 %v380, %v379
          %vm382 = vcmp.lt.s32.totalorder %v381, 8
          %v383 = vsel %vm382, %v300, 0.0
          %v384 = vsel %vm382, %v341, 0
          %v385 = vld [vmem:[#allocation2] sm:$0x1]
          %vm386 = vcmask 7168
          %v387 = vsel %vm386, %v383, 0.0
          %388 = vadd.xlane.f32.xlu0 %v387
          %v389 = vpop.xlane.xlu0 %388
          %v390 = vrot.slane %v389, 4
          %v391 = vadd.f32 %v389, %v390
          %v392 = vrot.slane %v391, 2
          %v393 = vadd.f32 %v391, %v392
          %v394 = vrot.slane %v393, 1
          %v395 = vadd.f32 %v393, %v394
          %s396 = vtos %v395
          %v397 = vstv %s396
          %v398 = vadd.f32 %v385, %v397
          %vm399 = vcmask 0
          %400 = vst.msk [vmem:[#allocation2] sm:$0x1] %vm399, %v398
          %v401 = vld [vmem:[#allocation3] sm:$0x1]
          %v402 = vrot.slane %v384, 4
          %v403 = vadd.s32 %v384, %v402
          %v404 = vrot.slane %v403, 2
          %v405 = vadd.s32 %v403, %v404
          %v406 = vrot.slane %v405, 1
          %v407 = vadd.s32 %v405, %v406
          %s408 = vtos %v407
          %v409 = vstv %s408
          %v410 = vadd.s32 %v401, %v409
          %411 = vst.msk [vmem:[#allocation3] sm:$0x1] %vm399, %v410
        $region48: #{tpu_custom_call.1} parent=27 // pred_fallthru
          _
        // Predicated region
        $region49: #{tpu_custom_call.1} parent=27 // pred_check
          %p412 = pneg %p271
        $region50: #{tpu_custom_call.1} parent=27 // pred_check_branch
          %414 = sbr.rel (%p412) target = $region52
        $region51: #{tpu_custom_call.1} parent=27 // pred_region
          %v415 = vld [vmem:[#allocation2] sm:$0x1]
          %v417 = vlaneseq
          %v418 = vshrl.u32 %v417, 7
          %v419 = vsub.s32 0, %v418
          %v420 = vrot.slane %v415, %v419
          %421 = vset.pattern.permute.xlu0 0
          %422 = vperm.xlu0 %421, %v420
          %v423 = vpop.permute.xlu0 %422
          %425 = vst [vmem:[%s256] sm:$0xff] %v423
          %v426 = vld [vmem:[#allocation3] sm:$0x1]
          %v427 = vlaneseq
          %v428 = vshrl.u32 %v427, 7
          %v429 = vsub.s32 0, %v428
          %v430 = vrot.slane %v426, %v429
          %431 = vset.pattern.permute.xlu0 0
          %432 = vperm.xlu0 %431, %v430
          %v433 = vpop.permute.xlu0 %432
          %434 = vst [vmem:[%s263] sm:$0xff] %v433
        $region52: #{tpu_custom_call.1} parent=27 // pred_fallthru
          _
        %s435 = sand.u32 %s111, 1
        %s436 = scalar_lea.sflag [#allocation6], %s435
        %s437 = sand.u32 %s111, 1
        %s438 = smul.addr %s437, 8
        %s439 = scalar_lea.vmem [#allocation9], %s438
        %s440 = sand.u32 %s137, 1
        %s441 = scalar_lea.sflag [#allocation11], %s440
        %s442 = sand.u32 %s137, 1
        %s443 = smul.addr %s442, 8
        %s444 = scalar_lea.vmem [#allocation10], %s443
        // Predicated region
        $region53: #{tpu_custom_call.1} parent=27 // pred_check
          %p445 = pneg %p121
        $region54: #{tpu_custom_call.1} parent=27 // pred_check_branch
          %447 = sbr.rel (%p445) target = $region56
        $region55: #{tpu_custom_call.1} parent=27 // pred_region
          %s449 = ssub.s32 128, 128
          %450 = vsyncadd %s436, %s449
          %s451 = smul.addr %s31, 128
          %s452 = scalar_lea.hbm %s2, %s451
          %s454 = sshll.u32 %s439, 4
          %s455 = int_to_ptr.vmem [resolvable:$true] %s454
          %457 = dma.vmem_to_hbm [thread:$0]  %s455, 128, %s452, %s436
        $region56: #{tpu_custom_call.1} parent=27 // pred_fallthru
          _
        // Predicated region
        $region57: #{tpu_custom_call.1} parent=27 // pred_check
          %p458 = pneg %p147
        $region58: #{tpu_custom_call.1} parent=27 // pred_check_branch
          %460 = sbr.rel (%p458) target = $region60
        $region59: #{tpu_custom_call.1} parent=27 // pred_region
          %s462 = ssub.s32 128, 128
          %463 = vsyncadd %s441, %s462
          %s464 = smul.addr %s31, 128
          %s465 = scalar_lea.hbm %s3, %s464
          %s467 = sshll.u32 %s444, 4
          %s468 = int_to_ptr.vmem [resolvable:$true] %s467
          %470 = dma.vmem_to_hbm [thread:$0]  %s468, 128, %s465, %s441
        $region60: #{tpu_custom_call.1} parent=27 // pred_fallthru
          _
      $region28: #{tpu_custom_call.1} parent=5 // pred_fallthru
        _
      %p471 = scmp.le.s32.totalorder 2, %s22
      // Predicated region
      $region61: #{tpu_custom_call.1} parent=5 // pred_check
        %p472 = pneg %p471
      $region62: #{tpu_custom_call.1} parent=5 // pred_check_branch
        %474 = sbr.rel (%p472) target = $region64
      $region63: #{tpu_custom_call.1} parent=5 // pred_region
        %s475 = ssub.s32 %s22, 2
        // Predicated region
        $region65: #{tpu_custom_call.1} parent=63 // pred_check
          %p476 = pneg %p127
        $region66: #{tpu_custom_call.1} parent=63 // pred_check_branch
          %478 = sbr.rel (%p476) target = $region68
        $region67: #{tpu_custom_call.1} parent=63 // pred_region
          %s479 = sand.u32 %s112, 1
          %s480 = scalar_lea.sflag [#allocation6], %s479
          %s481 = sand.u32 %s112, 1
          %s482 = smul.addr %s481, 8
          %s483 = scalar_lea.vmem [#allocation9], %s482
          %484 = dma.done %s480, 128
        $region68: #{tpu_custom_call.1} parent=63 // pred_fallthru
          _
        // Predicated region
        $region69: #{tpu_custom_call.1} parent=63 // pred_check
          %p485 = pneg %p153
        $region70: #{tpu_custom_call.1} parent=63 // pred_check_branch
          %487 = sbr.rel (%p485) target = $region72
        $region71: #{tpu_custom_call.1} parent=63 // pred_region
          %s488 = sand.u32 %s138, 1
          %s489 = scalar_lea.sflag [#allocation11], %s488
          %s490 = sand.u32 %s138, 1
          %s491 = smul.addr %s490, 8
          %s492 = scalar_lea.vmem [#allocation10], %s491
          %493 = dma.done %s489, 128
        $region72: #{tpu_custom_call.1} parent=63 // pred_fallthru
          _
      $region64: #{tpu_custom_call.1} parent=5 // pred_fallthru
        _
    $region6: #{tpu_custom_call.1} parent=1 // loop_footer
      %s26 = sadd.s32 1, %s22
    $region7: #{tpu_custom_call.1} parent=1 // loop_footer_branch
      %21 = sbr.rel target = $region3
    $region8: #{tpu_custom_call.1} parent=1 // loop_exit
      _
    %494 = vsyncpa [#allocation5], 1
    %s495 = scalar_lea.sflag [#allocation5], 1
    %496 = vsyncpa %s495, 1
    %497 = vsyncpa [#allocation8], 1
    %s498 = scalar_lea.sflag [#allocation8], 1
    %499 = vsyncpa %s498, 1
    %500 = vsyncpa [#allocation6], 1
    %s501 = scalar_lea.sflag [#allocation6], 1
    %502 = vsyncpa %s501, 1
    %503 = vsyncpa [#allocation11], 1
    %s504 = scalar_lea.sflag [#allocation11], 1
    %505 = vsyncpa %s504, 1

</llo_original>
